<compile_context>
chip_gen: v5e
topology: v5e:2x2
jax: 0.10.0
libtpu: 0.0.40
codegen_flags: <defaults>
</compile_context>

<pallas_src>
import jax
import jax.numpy as jnp
from jax.experimental import pallas as pl
from jax.experimental.pallas import tpu as pltpu


# ----------------------------- kernels --------------------------------------


def _affine_mask_kernel(x_ref, scale_ref, bias_ref, mask_ref, z_ref):
    # x_ref:    (1, tile_c, tile_t)
    # scale_ref/bias_ref: (1, tile_c, 1)   (already exp-folded, in x.dtype)
    # mask_ref: (1, 1, tile_t)
    x = x_ref[...]
    z_ref[...] = ((scale_ref[...] * x + bias_ref[...]) * mask_ref[...]).astype(
        z_ref.dtype
    )


def _affine_kernel(x_ref, scale_ref, bias_ref, z_ref):
    x = x_ref[...]
    z_ref[...] = (scale_ref[...] * x + bias_ref[...]).astype(z_ref.dtype)


# --------------------------- tiling helpers ----------------------------------


def _vmem_config():
    """Per-generation (block_budget_bytes, vmem_limit_bytes)."""
    try:
        info = pltpu.get_tpu_info()
        cap = getattr(info, "vmem_capacity_bytes", 64 << 20)
    except Exception:  # pragma: no cover - conservative fallback
        cap = 64 << 20
    if cap <= (64 << 20):
        # v7x: 64 MiB physical VMEM -> 8 MiB x-blocks, 44 MiB scoped limit
        # (2x double-buffered x + z = 32 MiB, plus mask/param streams).
        return 8 << 20, 44 << 20
    # v5e / v6e: 128 MiB physical -> bigger blocks amortize step overhead.
    return 12 << 20, 80 << 20


def _pick_tiles(B, C, T, itemsize, block_budget_bytes):
    """Choose (tile_c, tile_t) for lane-dense, budget-respecting blocks."""
    sub = max(8, 32 // max(itemsize, 1))  # sublane multiple for packed dtypes
    bytes_per_lane_row = 128 * itemsize

    if C * bytes_per_lane_row > block_budget_bytes:
        # Large-C fallback: tile channels (sublane-aligned), keep 128 lanes.
        tile_t = T if T < 128 else 128
        tile_c = max(sub, (block_budget_bytes // bytes_per_lane_row) // sub * sub)
        tile_c = min(tile_c, C)
        return tile_c, tile_t

    # Full-C block; largest multiple of 128 along T under the budget.
    max_t = max(128, (block_budget_bytes // max(C * itemsize, 1)) // 128 * 128)
    tile_t = T if T <= max_t else max_t

    # Small-grid guard: give megacore (v7x) + the pipeline enough steps.
    min_steps = 4
    while tile_t > 128 and B * pl.cdiv(T, tile_t) < min_steps:
        tile_t = max(128, ((tile_t // 2) // 128) * 128)
    return C, tile_t


# ------------------------------ wrapper --------------------------------------


def actnorm_forward_pallas(x, logs, bias, x_mask=None, reverse=False):
    """x: (B, C, T); logs/bias: (C,) or (1, C, 1); x_mask: (B, 1, T) or None.

    Matches ActNorm.forward: returns (z, logdet) for reverse=False,
    and z alone for reverse=True. logdet is kept in float32.
    """
    B, C, T = x.shape

    logs3 = jnp.reshape(logs, (1, C, 1)).astype(jnp.float32)
    bias3 = jnp.reshape(bias, (1, C, 1)).astype(jnp.float32)

    if reverse:
        # (x - bias) * exp(-logs) == exp(-logs) * x + (-bias * exp(-logs))
        scale_f = jnp.exp(-logs3)
        offset_f = -bias3 * scale_f
    else:
        scale_f = jnp.exp(logs3)
        offset_f = bias3
    # One-time C-element fold (XLA); kernel sees pre-cast params -> no per-step
    # exp or dtype casts.
    scale_k = scale_f.astype(x.dtype)
    offset_k = offset_f.astype(x.dtype)

    block_budget, vmem_limit = _vmem_config()
    tile_c, tile_t = _pick_tiles(B, C, T, x.dtype.itemsize, block_budget)
    grid = (B, pl.cdiv(C, tile_c), pl.cdiv(T, tile_t))

    x_spec = pl.BlockSpec((1, tile_c, tile_t), lambda b, c, t: (b, c, t))
    p_spec = pl.BlockSpec((1, tile_c, 1), lambda b, c, t: (0, c, 0))
    cparams = pltpu.CompilerParams(
        dimension_semantics=("parallel", "parallel", "parallel"),
        vmem_limit_bytes=vmem_limit,
    )

    if x_mask is None:
        # Mask-free specialization: no ones() materialization, no mask DMA,
        # no mask multiply.
        z = pl.pallas_call(
            _affine_kernel,
            out_shape=jax.ShapeDtypeStruct((B, C, T), x.dtype),
            grid=grid,
            in_specs=[x_spec, p_spec, p_spec],
            out_specs=x_spec,
            compiler_params=cparams,
        )(x, scale_k, offset_k)
        if reverse:
            return z
        x_len = jnp.full((B,), float(T), dtype=jnp.float32)
        logdet = jnp.sum(logs3) * x_len
        return z, logdet

    x_mask = x_mask.astype(x.dtype)
    m_spec = pl.BlockSpec((1, 1, tile_t), lambda b, c, t: (b, 0, t))
    z = pl.pallas_call(
        _affine_mask_kernel,
        out_shape=jax.ShapeDtypeStruct((B, C, T), x.dtype),
        grid=grid,
        in_specs=[x_spec, p_spec, p_spec, m_spec],
        out_specs=x_spec,
        compiler_params=cparams,
    )(x, scale_k, offset_k, x_mask)

    if reverse:
        return z
    x_len = jnp.sum(x_mask.astype(jnp.float32), axis=(1, 2))
    logdet = jnp.sum(logs3) * x_len
    return z, logdet


# ----------------------------- reference -------------------------------------


def actnorm_ref(x, logs, bias, x_mask=None, reverse=False):
    # pure-JAX reference of the PyTorch forward (initialized=True path)
    B, C, T = x.shape
    if x_mask is None:
        x_mask = jnp.ones((B, 1, T), dtype=x.dtype)
    logs3 = jnp.reshape(logs, (1, C, 1)).astype(jnp.float32)
    bias3 = jnp.reshape(bias, (1, C, 1)).astype(jnp.float32)
    xf = x.astype(jnp.float32)
    mf = x_mask.astype(jnp.float32)
    if reverse:
        return ((xf - bias3) * jnp.exp(-logs3) * mf).astype(x.dtype)
    z = (bias3 + jnp.exp(logs3) * xf) * mf
    x_len = jnp.sum(mf, axis=(1, 2))
    logdet = jnp.sum(logs3) * x_len
    return z.astype(x.dtype), logdet  # logdet stays f32 (parameter dtype)


# TODO(synk): the ddi=True data-dependent initialization (ActNorm.initialize)
# is a stateful, training-time parameter update; it is not part of the
# kernelized forward pass and is intentionally not implemented here.


if __name__ == "__main__":
    B, C, T = 2, 4, 16
    key = jax.random.PRNGKey(0)
    kx, kl, kb = jax.random.split(key, 3)

    x = jax.random.normal(kx, (B, C, T), dtype=jnp.float32)
    # nn.Parameter shape (1, C, 1); use small random values so test is non-trivial.
    logs = 0.1 * jax.random.normal(kl, (1, C, 1), dtype=jnp.float32)
    bias = 0.1 * jax.random.normal(kb, (1, C, 1), dtype=jnp.float32)
    # mask with padding: sample 0 full length, sample 1 valid up to t=10
    lengths = jnp.array([T, 10], dtype=jnp.int32)
    x_mask = (jnp.arange(T)[None, None, :] < lengths[:, None, None]).astype(
        jnp.float32
    )

    # sanity-check tile selection helper (no kernel launch needed)
    tc, tt = _pick_tiles(1, 32768, 4096, 4, 8 << 20)
    assert tc % 8 == 0 and tc * 128 * 4 <= (8 << 20) and tt == 128
    tc, tt = _pick_tiles(1, 192, 8192, 4, 8 << 20)
    assert tc == 192 and tt % 128 == 0 and tt <= 8192

    # forward with explicit mask
    z, logdet = actnorm_forward_pallas(x, logs, bias, x_mask)
    z = jax.block_until_ready(z)
    z_ref, logdet_ref = actnorm_ref(x, logs, bias, x_mask)
    assert z.shape == (B, C, T) and logdet.shape == (B,)
    assert jnp.allclose(z, z_ref, atol=1e-6, rtol=1e-6)
    assert jnp.allclose(logdet, logdet_ref, atol=1e-6, rtol=1e-6)

    # forward with default (None -> mask-free specialized kernel)
    z2, logdet2 = actnorm_forward_pallas(x, logs, bias)
    z2_ref, logdet2_ref = actnorm_ref(x, logs, bias)
    assert jnp.allclose(jax.block_until_ready(z2), z2_ref, atol=1e-6, rtol=1e-6)
    assert jnp.allclose(logdet2, logdet2_ref, atol=1e-6, rtol=1e-6)

    # reverse path inverts the forward (same kernel, folded parameters)
    x_rec = actnorm_forward_pallas(z2, logs, bias, reverse=True)
    assert jnp.allclose(jax.block_until_ready(x_rec), x, atol=1e-5, rtol=1e-5)

    # reverse path with mask matches reference
    x_rev = actnorm_forward_pallas(x, logs, bias, x_mask, reverse=True)
    x_rev_ref = actnorm_ref(x, logs, bias, x_mask, reverse=True)
    assert jnp.allclose(jax.block_until_ready(x_rev), x_rev_ref, atol=1e-6, rtol=1e-6)

    print("KERNEL_OK")
</pallas_src>

<mosaic_0001>
module attributes {stable_mosaic.version = 11 : i64} {
  func.func @_affine_mask_kernel(%arg0: i32, %arg1: i32, %arg2: i32, %arg3: memref<1x4x16xf32, #tpu.memory_space<vmem>>, %arg4: memref<1x4x1xf32, #tpu.memory_space<vmem>>, %arg5: memref<1x4x1xf32, #tpu.memory_space<vmem>>, %arg6: memref<1x1x16xf32, #tpu.memory_space<vmem>>, %arg7: memref<1x4x16xf32, #tpu.memory_space<vmem>>) attributes {dimension_semantics = [#tpu.dimension_semantics<parallel>, #tpu.dimension_semantics<parallel>, #tpu.dimension_semantics<parallel>], iteration_bounds = array<i64: 2, 1, 1>, scalar_prefetch = 0 : i64, scratch_operands = 0 : i64, tpu.core_type = #tpu.core_type<tc>, window_params = [{transform_indices = @transform_0, window_bounds = array<i64: 1, 4, 16>}, {transform_indices = @transform_1, window_bounds = array<i64: 1, 4, 1>}, {transform_indices = @transform_2, window_bounds = array<i64: 1, 4, 1>}, {transform_indices = @transform_3, window_bounds = array<i64: 1, 1, 16>}, {transform_indices = @transform_4, window_bounds = array<i64: 1, 4, 16>}]} {
    %c0 = arith.constant 0 : index
    %c0_0 = arith.constant 0 : index
    %c0_1 = arith.constant 0 : index
    %0 = vector.load %arg3[%c0, %c0_0, %c0_1] : memref<1x4x16xf32, #tpu.memory_space<vmem>>, vector<1x4x16xf32>
    %c0_2 = arith.constant 0 : index
    %c0_3 = arith.constant 0 : index
    %c0_4 = arith.constant 0 : index
    %1 = vector.load %arg4[%c0_2, %c0_3, %c0_4] : memref<1x4x1xf32, #tpu.memory_space<vmem>>, vector<1x4x1xf32>
    %2 = vector.broadcast %1 : vector<1x4x1xf32> to vector<1x4x16xf32>
    %3 = arith.mulf %2, %0 : vector<1x4x16xf32>
    %c0_5 = arith.constant 0 : index
    %c0_6 = arith.constant 0 : index
    %c0_7 = arith.constant 0 : index
    %4 = vector.load %arg5[%c0_5, %c0_6, %c0_7] : memref<1x4x1xf32, #tpu.memory_space<vmem>>, vector<1x4x1xf32>
    %5 = vector.broadcast %4 : vector<1x4x1xf32> to vector<1x4x16xf32>
    %6 = arith.addf %3, %5 : vector<1x4x16xf32>
    %c0_8 = arith.constant 0 : index
    %c0_9 = arith.constant 0 : index
    %c0_10 = arith.constant 0 : index
    %7 = vector.load %arg6[%c0_8, %c0_9, %c0_10] : memref<1x1x16xf32, #tpu.memory_space<vmem>>, vector<1x1x16xf32>
    %8 = vector.broadcast %7 : vector<1x1x16xf32> to vector<1x4x16xf32>
    %9 = arith.mulf %6, %8 : vector<1x4x16xf32>
    %c0_11 = arith.constant 0 : index
    %c0_12 = arith.constant 0 : index
    %c0_13 = arith.constant 0 : index
    %10 = vector.load %arg7[%c0_11, %c0_12, %c0_13] : memref<1x4x16xf32, #tpu.memory_space<vmem>>, vector<1x4x16xf32>
    tpu.vector_store %arg7[%c0_11, %c0_12, %c0_13], %9 {strides = array<i32>} : memref<1x4x16xf32, #tpu.memory_space<vmem>>, vector<1x4x16xf32>,
    return
  }
  func.func @transform_0(%arg0: i32, %arg1: i32, %arg2: i32) -> (i32, i32, i32) {
    %c0_i32 = arith.constant 0 : i32
    return %arg0, %arg1, %arg2 : i32, i32, i32
  }
  func.func @transform_1(%arg0: i32, %arg1: i32, %arg2: i32) -> (i32, i32, i32) {
    %c0_i32 = arith.constant 0 : i32
    %c0_i32_0 = arith.constant 0 : i32
    %c0_i32_1 = arith.constant 0 : i32
    return %c0_i32, %arg1, %c0_i32_0 : i32, i32, i32
  }
  func.func @transform_2(%arg0: i32, %arg1: i32, %arg2: i32) -> (i32, i32, i32) {
    %c0_i32 = arith.constant 0 : i32
    %c0_i32_0 = arith.constant 0 : i32
    %c0_i32_1 = arith.constant 0 : i32
    return %c0_i32, %arg1, %c0_i32_0 : i32, i32, i32
  }
  func.func @transform_3(%arg0: i32, %arg1: i32, %arg2: i32) -> (i32, i32, i32) {
    %c0_i32 = arith.constant 0 : i32
    %c0_i32_0 = arith.constant 0 : i32
    return %arg0, %c0_i32, %arg2 : i32, i32, i32
  }
  func.func @transform_4(%arg0: i32, %arg1: i32, %arg2: i32) -> (i32, i32, i32) {
    %c0_i32 = arith.constant 0 : i32
    return %arg0, %arg1, %arg2 : i32, i32, i32
  }
}

</mosaic_0001>

<llo_original>
// kernel: tpu_custom_call.1
$region0: #{tpu_custom_call.1}
  #allocation0 [shape = 'u32[]', space=smem, size = 0x4, offset = 0x4, fixed_abs, tag = 'smem constant byte address 0x4 - core index']
  #allocation1 [shape = 'u32[72,128]{1,0:T(1,128)}', space=vmem, size = 0x9000, scoped, tag = 'internal scratch']
  %s0 = inlined_call_operand.vmem [shape: f32[2,4,16], index: 0, kind: input, shape index: {}]
  %s1 = inlined_call_operand.vmem [shape: f32[1,4,1], index: 1, kind: input, shape index: {}]
  %s2 = inlined_call_operand.vmem [shape: f32[1,4,1], index: 2, kind: input, shape index: {}]
  %s3 = inlined_call_operand.vmem [shape: f32[2,1,16], index: 3, kind: input, shape index: {}]
  %s4 = inlined_call_operand.hbm [shape: f32[2,4,16], index: 4, kind: output, shape index: {}]
  %s5 = sld [smem:[#allocation0]]
  $region49: #{tpu_custom_call.1} parent=0
    _
  %s7 = ssub.s32 1, %s5
  %s8 = scalar_select 0, %s7, %s5
  $region1: #{tpu_custom_call.1} parent=0
    #allocation2 [shape = 'u8[4096]{0}', space=vmem, size = 0x1000, scoped, tag = 'output window, operand 0']
    #allocation3 [shape = 's32[2]{0}', space=sflag, size = 0x8, scoped, tag = 'scoped memory for tpu_custom_call.1']
    %9 = vsyncpa [#allocation3], 0
    %s10 = scalar_lea.sflag [#allocation3], 1
    %11 = vsyncpa %s10, 0
    loop: start=0, step=1, limit=4
    $region2: #{tpu_custom_call.1} parent=1 // loop_pre_header
      _
    $region3: #{tpu_custom_call.1} parent=1 // loop_header
      %s13 = sphi 0, %s17
      %p14 = scmp.ge.s32.totalorder %s13, 4
      %s20 = sphi 0, %s39
      %s21 = sphi 0, %s35
      %s22 = sphi 0, %s31
      %s23 = sphi 0, %s20
      %s24 = sphi 0, %s21
      %s25 = sphi 0, %s22
      %s26 = sphi 0, %s23
      %s27 = sphi 0, %s24
      %s28 = sphi 0, %s25
      %s46 = sphi 0, %s48
      %s49 = sphi 0, %s46
      %s50 = sphi 0, %s49
      %s66 = sphi 0, %s50
      %s72 = sphi 0, %s74
      %s75 = sphi 0, %s72
      %s76 = sphi 0, %s75
      %s92 = sphi 0, %s76
      %s98 = sphi 0, %s100
      %s101 = sphi 0, %s98
      %s102 = sphi 0, %s101
      %s118 = sphi 0, %s102
      %s126 = sphi 0, %s128
      %s129 = sphi 0, %s126
      %s130 = sphi 0, %s129
      %s146 = sphi 0, %s130
      %s156 = sphi 0, %s158
      %s159 = sphi 0, %s156
      %s160 = sphi 0, %s159
      %s176 = sphi 0, %s160
    $region4: #{tpu_custom_call.1} parent=1 // loop_header_branch
      %16 = sbr.rel (%p14) target = $region8
    $region5: #{tpu_custom_call.1} parent=1 // loop_body
      %s18 = ssub.s32 %s13, 1
      %s19 = ssub.s32 %s13, 2
      %s29 = sadd.s32 1, %s22
      %p30 = scmp.ge.s32.totalorder %s29, 1
      %s31 = scalar_select %p30, 0, %s29
      %s32 = sadd.s32 1, %s21
      %s33 = scalar_select %p30, %s32, %s21
      %p34 = scmp.ge.s32.totalorder %s33, 1
      %s35 = scalar_select %p34, 0, %s33
      %s36 = sadd.s32 1, %s20
      %s37 = scalar_select %p34, %s36, %s20
      %p38 = scmp.ge.s32.totalorder %s37, 2
      %s39 = scalar_select %p38, 0, %s37
      %s40 = ssub.s32 %s20, %s39
      %s41 = ssub.s32 %s21, %s35
      %s42 = sor.u32 %s40, %s41
      %s43 = ssub.s32 %s22, %s31
      %s44 = sor.u32 %s42, %s43
      %p45 = scmp.eq.s32.totalorder %s44, 0
      %s47 = sadd.s32 %s46, 1
      %s48 = scalar_select %p45, %s46, %s47
      %p51 = pneg %p45
      %p52 = scmp.eq.s32.totalorder %s13, 1
      %p53 = por %p51, %p52
      %p54 = scmp.ne.s32.totalorder %s46, %s49
      %p55 = scmp.eq.s32.totalorder %s13, 0
      %p56 = por %p54, %p55
      %p57 = scmp.ne.s32.totalorder %s46, %s49
      %p58 = scmp.eq.s32.totalorder %s18, 1
      %p59 = por %p57, %p58
      %p60 = scmp.ne.s32.totalorder %s49, %s50
      %p61 = scmp.eq.s32.totalorder %s18, 0
      %p62 = por %p60, %p61
      %p63 = scmp.ne.s32.totalorder %s49, %s50
      %p64 = scmp.eq.s32.totalorder %s19, 1
      %p65 = por %p63, %p64
      %p67 = scmp.ne.s32.totalorder %s50, %s66
      %p68 = scmp.eq.s32.totalorder %s19, 0
      %p69 = por %p67, %p68
      %s70 = ssub.s32 %s21, %s35
      %p71 = scmp.eq.s32.totalorder %s70, 0
      %s73 = sadd.s32 %s72, 1
      %s74 = scalar_select %p71, %s72, %s73
      %p77 = pneg %p71
      %p78 = scmp.eq.s32.totalorder %s13, 1
      %p79 = por %p77, %p78
      %p80 = scmp.ne.s32.totalorder %s72, %s75
      %p81 = scmp.eq.s32.totalorder %s13, 0
      %p82 = por %p80, %p81
      %p83 = scmp.ne.s32.totalorder %s72, %s75
      %p84 = scmp.eq.s32.totalorder %s18, 1
      %p85 = por %p83, %p84
      %p86 = scmp.ne.s32.totalorder %s75, %s76
      %p87 = scmp.eq.s32.totalorder %s18, 0
      %p88 = por %p86, %p87
      %p89 = scmp.ne.s32.totalorder %s75, %s76
      %p90 = scmp.eq.s32.totalorder %s19, 1
      %p91 = por %p89, %p90
      %p93 = scmp.ne.s32.totalorder %s76, %s92
      %p94 = scmp.eq.s32.totalorder %s19, 0
      %p95 = por %p93, %p94
      %s96 = ssub.s32 %s21, %s35
      %p97 = scmp.eq.s32.totalorder %s96, 0
      %s99 = sadd.s32 %s98, 1
      %s100 = scalar_select %p97, %s98, %s99
      %p103 = pneg %p97
      %p104 = scmp.eq.s32.totalorder %s13, 1
      %p105 = por %p103, %p104
      %p106 = scmp.ne.s32.totalorder %s98, %s101
      %p107 = scmp.eq.s32.totalorder %s13, 0
      %p108 = por %p106, %p107
      %p109 = scmp.ne.s32.totalorder %s98, %s101
      %p110 = scmp.eq.s32.totalorder %s18, 1
      %p111 = por %p109, %p110
      %p112 = scmp.ne.s32.totalorder %s101, %s102
      %p113 = scmp.eq.s32.totalorder %s18, 0
      %p114 = por %p112, %p113
      %p115 = scmp.ne.s32.totalorder %s101, %s102
      %p116 = scmp.eq.s32.totalorder %s19, 1
      %p117 = por %p115, %p116
      %p119 = scmp.ne.s32.totalorder %s102, %s118
      %p120 = scmp.eq.s32.totalorder %s19, 0
      %p121 = por %p119, %p120
      %s122 = ssub.s32 %s20, %s39
      %s123 = ssub.s32 %s22, %s31
      %s124 = sor.u32 %s122, %s123
      %p125 = scmp.eq.s32.totalorder %s124, 0
      %s127 = sadd.s32 %s126, 1
      %s128 = scalar_select %p125, %s126, %s127
      %p131 = pneg %p125
      %p132 = scmp.eq.s32.totalorder %s13, 1
      %p133 = por %p131, %p132
      %p134 = scmp.ne.s32.totalorder %s126, %s129
      %p135 = scmp.eq.s32.totalorder %s13, 0
      %p136 = por %p134, %p135
      %p137 = scmp.ne.s32.totalorder %s126, %s129
      %p138 = scmp.eq.s32.totalorder %s18, 1
      %p139 = por %p137, %p138
      %p140 = scmp.ne.s32.totalorder %s129, %s130
      %p141 = scmp.eq.s32.totalorder %s18, 0
      %p142 = por %p140, %p141
      %p143 = scmp.ne.s32.totalorder %s129, %s130
      %p144 = scmp.eq.s32.totalorder %s19, 1
      %p145 = por %p143, %p144
      %p147 = scmp.ne.s32.totalorder %s130, %s146
      %p148 = scmp.eq.s32.totalorder %s19, 0
      %p149 = por %p147, %p148
      %s150 = ssub.s32 %s20, %s39
      %s151 = ssub.s32 %s21, %s35
      %s152 = sor.u32 %s150, %s151
      %s153 = ssub.s32 %s22, %s31
      %s154 = sor.u32 %s152, %s153
      %p155 = scmp.eq.s32.totalorder %s154, 0
      %s157 = sadd.s32 %s156, 1
      %s158 = scalar_select %p155, %s156, %s157
      %p161 = pneg %p155
      %p162 = scmp.eq.s32.totalorder %s13, 1
      %p163 = por %p161, %p162
      %p164 = scmp.ne.s32.totalorder %s156, %s159
      %p165 = scmp.eq.s32.totalorder %s13, 0
      %p166 = por %p164, %p165
      %p167 = scmp.ne.s32.totalorder %s156, %s159
      %p168 = scmp.eq.s32.totalorder %s18, 1
      %p169 = por %p167, %p168
      %p170 = scmp.ne.s32.totalorder %s159, %s160
      %p171 = scmp.eq.s32.totalorder %s18, 0
      %p172 = por %p170, %p171
      %p173 = scmp.ne.s32.totalorder %s159, %s160
      %p174 = scmp.eq.s32.totalorder %s19, 1
      %p175 = por %p173, %p174
      %p177 = scmp.ne.s32.totalorder %s160, %s176
      %p178 = scmp.eq.s32.totalorder %s19, 0
      %p179 = por %p177, %p178
      %p180 = scmp.le.s32.totalorder 1, %s13
      %p181 = scmp.lt.s32.totalorder %s13, 3
      %p182 = pnand %p180, %p181
      %p183 = pneg %p182
      // Predicated region
      $region9: #{tpu_custom_call.1} parent=5 // pred_check
        _
      $region10: #{tpu_custom_call.1} parent=5 // pred_check_branch
        %185 = sbr.rel (%p182) target = $region12
      $region11: #{tpu_custom_call.1} parent=5 // pred_region
        %s186 = ssub.s32 %s13, 1
        // Predicated region
        $region13: #{tpu_custom_call.1} parent=11 // pred_check
          %p187 = pneg %p88
        $region14: #{tpu_custom_call.1} parent=11 // pred_check_branch
          %189 = sbr.rel (%p187) target = $region16
        $region15: #{tpu_custom_call.1} parent=11 // pred_region
          %p190 = scmp.lt.s32.totalorder %s24, 0
          %s191 = scalar_select %p190, %s24, 0
          %s192 = smul.addr %s191, 4
          %s193 = scalar_lea.vmem %s1, %s192
        $region16: #{tpu_custom_call.1} parent=11 // pred_fallthru
          _
        // Predicated region
        $region17: #{tpu_custom_call.1} parent=11 // pred_check
          %p194 = pneg %p114
        $region18: #{tpu_custom_call.1} parent=11 // pred_check_branch
          %196 = sbr.rel (%p194) target = $region20
        $region19: #{tpu_custom_call.1} parent=11 // pred_region
          %p197 = scmp.lt.s32.totalorder %s24, 0
          %s198 = scalar_select %p197, %s24, 0
          %s199 = smul.addr %s198, 4
          %s200 = scalar_lea.vmem %s2, %s199
        $region20: #{tpu_custom_call.1} parent=11 // pred_fallthru
          _
      $region12: #{tpu_custom_call.1} parent=5 // pred_fallthru
        _
      %p201 = scmp.lt.s32.totalorder %s13, 2
      // Predicated region
      $region21: #{tpu_custom_call.1} parent=5 // pred_check
        %p202 = pneg %p201
      $region22: #{tpu_custom_call.1} parent=5 // pred_check_branch
        %204 = sbr.rel (%p202) target = $region24
      $region23: #{tpu_custom_call.1} parent=5 // pred_region
        // Predicated region
        $region25: #{tpu_custom_call.1} parent=23 // pred_check
          %p205 = pneg %p56
        $region26: #{tpu_custom_call.1} parent=23 // pred_check_branch
          %207 = sbr.rel (%p205) target = $region28
        $region27: #{tpu_custom_call.1} parent=23 // pred_region
          %p208 = scmp.lt.s32.totalorder %s20, 1
          %s209 = scalar_select %p208, %s20, 1
          %p210 = scmp.lt.s32.totalorder %s21, 0
          %s211 = scalar_select %p210, %s21, 0
          %p212 = scmp.lt.s32.totalorder %s22, 0
          %s213 = scalar_select %p212, %s22, 0
          %s214 = sadd.s32 %s213, %s211
          %s215 = sadd.s32 %s214, %s209
          %s216 = smul.addr %s215, 4
          %s217 = scalar_lea.vmem %s0, %s216
        $region28: #{tpu_custom_call.1} parent=23 // pred_fallthru
          _
        // Predicated region
        $region29: #{tpu_custom_call.1} parent=23 // pred_check
          %p218 = pneg %p136
        $region30: #{tpu_custom_call.1} parent=23 // pred_check_branch
          %220 = sbr.rel (%p218) target = $region32
        $region31: #{tpu_custom_call.1} parent=23 // pred_region
          %p221 = scmp.lt.s32.totalorder %s20, 1
          %s222 = scalar_select %p221, %s20, 1
          %p223 = scmp.lt.s32.totalorder %s22, 0
          %s224 = scalar_select %p223, %s22, 0
          %s225 = sadd.s32 %s224, %s222
          %s226 = scalar_lea.vmem %s3, %s225
        $region32: #{tpu_custom_call.1} parent=23 // pred_fallthru
          _
      $region24: #{tpu_custom_call.1} parent=5 // pred_fallthru
        _
      %p227 = scmp.le.s32.totalorder 1, %s13
      %p228 = scmp.lt.s32.totalorder %s13, 3
      %p229 = pnand %p227, %p228
      %p230 = pneg %p229
      // Predicated region
      $region33: #{tpu_custom_call.1} parent=5 // pred_check
        _
      $region34: #{tpu_custom_call.1} parent=5 // pred_check_branch
        %232 = sbr.rel (%p229) target = $region36
      $region35: #{tpu_custom_call.1} parent=5 // pred_region
        %s233 = ssub.s32 %s13, 1
        %p234 = scmp.lt.s32.totalorder %s23, 1
        %s235 = scalar_select %p234, %s23, 1
        %p236 = scmp.lt.s32.totalorder %s24, 0
        %s237 = scalar_select %p236, %s24, 0
        %p238 = scmp.lt.s32.totalorder %s25, 0
        %s239 = scalar_select %p238, %s25, 0
        %s240 = sadd.s32 %s239, %s237
        %s241 = sadd.s32 %s240, %s235
        %s242 = smul.addr %s241, 4
        %s243 = scalar_lea.vmem %s0, %s242
        %p244 = pneg %p62
        %p245 = pneg %p59
        %p246 = scmp.lt.s32.totalorder %s24, 0
        %s247 = scalar_select %p246, %s24, 0
        %s248 = smul.addr %s247, 4
        %s249 = scalar_lea.vmem %s1, %s248
        %p250 = pneg %p88
        %p251 = pneg %p85
        %p252 = scmp.lt.s32.totalorder %s24, 0
        %s253 = scalar_select %p252, %s24, 0
        %s254 = smul.addr %s253, 4
        %s255 = scalar_lea.vmem %s2, %s254
        %p256 = pneg %p114
        %p257 = pneg %p111
        %p258 = scmp.lt.s32.totalorder %s23, 1
        %s259 = scalar_select %p258, %s23, 1
        %p260 = scmp.lt.s32.totalorder %s25, 0
        %s261 = scalar_select %p260, %s25, 0
        %s262 = sadd.s32 %s261, %s259
        %s263 = scalar_lea.vmem %s3, %s262
        %p264 = pneg %p142
        %p265 = pneg %p139
        %p266 = pneg %p172
        %p267 = pneg %p169
        %s268 = sand.u32 %s159, 1
        %s269 = scalar_lea.sflag [#allocation3], %s268
        %s270 = sand.u32 %s159, 1
        %s271 = smul.addr %s270, 4
        %s272 = scalar_lea.vmem [#allocation2], %s271
        %p273 = scmp.lt.s32.totalorder %s23, 1
        %s274 = scalar_select %p273, %s23, 1
        %p275 = scmp.lt.s32.totalorder %s24, 0
        %s276 = scalar_select %p275, %s24, 0
        %p277 = scmp.lt.s32.totalorder %s25, 0
        %s278 = scalar_select %p277, %s25, 0
        %s279 = sadd.s32 %s278, %s276
        %s280 = sadd.s32 %s279, %s274
        %s281 = smul.addr %s280, 4
        %s282 = scalar_lea.vmem %s0, %s281
        %p283 = scmp.lt.s32.totalorder %s24, 0
        %s284 = scalar_select %p283, %s24, 0
        %s285 = smul.addr %s284, 4
        %s286 = scalar_lea.vmem %s1, %s285
        %p287 = scmp.lt.s32.totalorder %s24, 0
        %s288 = scalar_select %p287, %s24, 0
        %s289 = smul.addr %s288, 4
        %s290 = scalar_lea.vmem %s2, %s289
        %p291 = scmp.lt.s32.totalorder %s23, 1
        %s292 = scalar_select %p291, %s23, 1
        %p293 = scmp.lt.s32.totalorder %s25, 0
        %s294 = scalar_select %p293, %s25, 0
        %s295 = sadd.s32 %s294, %s292
        %s296 = scalar_lea.vmem %s3, %s295
        %v297 = vld [vmem:[%s282] sm:$0xf]
        %v298 = vld [vmem:[%s286] sm:$0xf]
        %300 = vset.pattern.permute.xlu0 0
        %301 = vperm.xlu0 %300, %v298
        %v302 = vpop.permute.xlu0 %301
        %v304 = vmul.f32 %v302, %v297
        %v305 = vld [vmem:[%s290] sm:$0xf]
        %307 = vset.pattern.permute.xlu0 0
        %308 = vperm.xlu0 %307, %v305
        %v309 = vpop.permute.xlu0 %308
        %v311 = vadd.f32 %v304, %v309
        %v312 = vld [vmem:[%s296] sm:$0x1]
        %v314 = vperm.slane %v312, 0
        %v316 = vmul.f32 %v311, %v314
        %vm317 = vcmask 125952
        %318 = vst.msk [vmem:[%s272] sm:$0xf] %vm317, %v316
        %s319 = sand.u32 %s159, 1
        %s320 = scalar_lea.sflag [#allocation3], %s319
        %s321 = sand.u32 %s159, 1
        %s322 = smul.addr %s321, 4
        %s323 = scalar_lea.vmem [#allocation2], %s322
        // Predicated region
        $region37: #{tpu_custom_call.1} parent=35 // pred_check
          %p324 = pneg %p169
        $region38: #{tpu_custom_call.1} parent=35 // pred_check_branch
          %326 = sbr.rel (%p324) target = $region40
        $region39: #{tpu_custom_call.1} parent=35 // pred_region
          %328 = vsyncadd %s320, 0
          %s329 = sadd.s32 %s25, %s24
          %s330 = sadd.s32 %s329, %s23
          %s331 = smul.addr %s330, 4
          %s332 = scalar_lea.hbm %s4, %s331
          %s334 = sshll.u32 %s323, 4
          %s335 = int_to_ptr.vmem [resolvable:$true] %s334
          %s336 = sshll.u32 %s332, 4
          %s337 = int_to_ptr.hbm [resolvable:$true] %s336
          %339 = dma.vmem_to_hbm [thread:$0]  %s335, 64, %s337, %s320
        $region40: #{tpu_custom_call.1} parent=35 // pred_fallthru
          _
      $region36: #{tpu_custom_call.1} parent=5 // pred_fallthru
        _
      %p340 = scmp.le.s32.totalorder 2, %s13
      // Predicated region
      $region41: #{tpu_custom_call.1} parent=5 // pred_check
        %p341 = pneg %p340
      $region42: #{tpu_custom_call.1} parent=5 // pred_check_branch
        %343 = sbr.rel (%p341) target = $region44
      $region43: #{tpu_custom_call.1} parent=5 // pred_region
        %s344 = ssub.s32 %s13, 2
        // Predicated region
        $region45: #{tpu_custom_call.1} parent=43 // pred_check
          %p345 = pneg %p175
        $region46: #{tpu_custom_call.1} parent=43 // pred_check_branch
          %347 = sbr.rel (%p345) target = $region48
        $region47: #{tpu_custom_call.1} parent=43 // pred_region
          %s348 = sand.u32 %s160, 1
          %s349 = scalar_lea.sflag [#allocation3], %s348
          %s350 = sand.u32 %s160, 1
          %s351 = smul.addr %s350, 4
          %s352 = scalar_lea.vmem [#allocation2], %s351
          %354 = dma.done %s349, 64
        $region48: #{tpu_custom_call.1} parent=43 // pred_fallthru
          _
      $region44: #{tpu_custom_call.1} parent=5 // pred_fallthru
        _
    $region6: #{tpu_custom_call.1} parent=1 // loop_footer
      %s17 = sadd.s32 1, %s13
    $region7: #{tpu_custom_call.1} parent=1 // loop_footer_branch
      %12 = sbr.rel target = $region3
    $region8: #{tpu_custom_call.1} parent=1 // loop_exit
      _
    %355 = vsyncpa [#allocation3], 1
    %s356 = scalar_lea.sflag [#allocation3], 1
    %357 = vsyncpa %s356, 1

</llo_original>
